<compile_context>
chip_gen: v7x
topology: tpu7x:2x2x1
jax: 0.10.0
libtpu: 0.0.40
codegen_flags: <defaults>
</compile_context>

<pallas_src>
import numpy as np
import jax
import jax.numpy as jnp
from jax import lax
from jax.experimental import pallas as pl
from jax.experimental.pallas import tpu as pltpu


def _round_up(x, m):
    return (x + m - 1) // m * m


def make_textcnn_kernel(Ks, L, F, TB, WB):
    """Kernel closed over static kernel sizes / seq length / tile sizes."""
    NT = max(Ks)          # number of taps (columns grouped per tap)
    N = TB * L            # flattened (batch_tile * seq_len) rows

    def kernel(emb_ref, w_ref, bconv_ref, wl_ref, bl_ref, out_ref):
        # (TB, L, D) bf16 -> (TB*L, D): sublane axis becomes B*L (denser rows).
        emb = emb_ref[...]
        emb2d = emb.reshape(N, emb.shape[-1])

        # ONE fused MXU matmul covering every tap of every kernel size.
        # p[:, i*WB + j*F + f] = <embed row, tap-i weights of kernel Ks[j]>.
        p = lax.dot_general(
            emb2d, w_ref[...],
            dimension_numbers=(((1,), (0,)), ((), ())),
            preferred_element_type=jnp.float32)          # (N, 128) f32

        # Sum tap contributions by rolling the small OUTPUT along the
        # sequence (sublane) axis -- XLU work, no input relayouts.
        # Conv bias is folded into the accumulator init.
        acc = p[:, 0:WB] + bconv_ref[...]                # (N, WB) f32
        for i in range(1, NT):
            q = pltpu.roll(p, shift=N - i, axis=0)       # q[n] = p[n + i]
            acc = acc + q[:, i * WB:(i + 1) * WB]

        acc = jnp.maximum(acc, 0.0)                      # ReLU, f32 on VPU

        # Zero rows outside each kernel size's valid conv range; this also
        # kills the roll wrap-around rows.  ReLU >= 0, so zeroing never
        # changes the max-pool result.
        row = lax.broadcasted_iota(jnp.int32, (N, WB), 0)
        col = lax.broadcasted_iota(jnp.int32, (N, WB), 1)
        l_pos = row % L                                  # position within sequence
        limit = jnp.zeros((N, WB), jnp.int32)
        for j, kk in enumerate(Ks):                      # static unrolled
            in_grp = (col >= j * F) & (col < (j + 1) * F)
            limit = jnp.where(in_grp, L - kk + 1, limit)
        acc = jnp.where(l_pos < limit, acc, 0.0)

        # Global max-pool over the sequence axis, per batch row.
        pooled = jnp.max(acc.reshape(TB, L, WB), axis=1)     # (TB, WB)

        # Final linear; 128-lane padded weights/bias -> lane-dense store.
        out_ref[...] = (
            jnp.dot(pooled, wl_ref[...], preferred_element_type=jnp.float32)
            + bl_ref[...])

    return kernel


def build_packed_params(params, Ks, F, D, C):
    """Pack conv weights/biases and the linear layer into MXU-friendly slabs."""
    NT = max(Ks)
    nk = len(Ks)
    WB = nk * F                      # one column block per tap: [k0|k1|k2]*F
    NCOL = NT * WB
    NCOL_PAD = _round_up(NCOL, 128)
    C_PAD = _round_up(C, 128)

    w_all = np.zeros((D, NCOL_PAD), np.float32)
    for i in range(NT):
        for j, kk in enumerate(Ks):
            if i < kk:
                w_all[:, i * WB + j * F: i * WB + (j + 1) * F] = np.asarray(
                    params[f"conv_w_{kk}"][i])
    b_cat = np.concatenate(
        [np.asarray(params[f"conv_b_{kk}"]).reshape(1, F) for kk in Ks], axis=1)

    wl_pad = np.zeros((WB, C_PAD), np.float32)
    wl_pad[:, :C] = np.asarray(params["lin_w"])
    bl_pad = np.zeros((1, C_PAD), np.float32)
    bl_pad[:, :C] = np.asarray(params["lin_b"]).reshape(1, C)

    return (jnp.asarray(w_all), jnp.asarray(b_cat.astype(np.float32)),
            jnp.asarray(wl_pad), jnp.asarray(bl_pad), WB, C_PAD)


def _pick_batch_tile(B, block_b):
    if B <= block_b:
        return B
    for cand in range(block_b, 7, -1):          # multiple of 8 that divides B
        if cand % 8 == 0 and B % cand == 0:
            return cand
    return B


def textcnn_forward(token_ids, params, Ks, n_filters, *, use_bf16=True, block_b=8):
    # Embedding gather stays in plain JAX (data-dependent gather).
    embed = params["embedding"][token_ids].astype(jnp.float32)   # (B, L, D)
    B, L, D = embed.shape
    C = params["lin_b"].shape[-1]
    F = n_filters

    w_all, b_cat, wl_pad, bl_pad, WB, C_PAD = build_packed_params(
        params, Ks, F, D, C)

    mxu_dtype = jnp.bfloat16 if use_bf16 else jnp.float32
    embed_in = embed.astype(mxu_dtype)
    w_in = w_all.astype(mxu_dtype)

    TB = _pick_batch_tile(B, block_b)
    grid = (B // TB,)

    kernel = make_textcnn_kernel(Ks, L, F, TB, WB)
    out_pad = pl.pallas_call(
        kernel,
        grid=grid,
        in_specs=[
            pl.BlockSpec((TB, L, D), lambda i: (i, 0, 0)),   # embed tile
            pl.BlockSpec(w_in.shape, lambda i: (0, 0)),      # fused conv weights
            pl.BlockSpec(b_cat.shape, lambda i: (0, 0)),     # conv biases [k0|k1|k2]
            pl.BlockSpec(wl_pad.shape, lambda i: (0, 0)),    # linear weight (padded)
            pl.BlockSpec(bl_pad.shape, lambda i: (0, 0)),    # linear bias (padded)
        ],
        out_specs=pl.BlockSpec((TB, C_PAD), lambda i: (i, 0)),
        out_shape=jax.ShapeDtypeStruct((B, C_PAD), jnp.float32),
        compiler_params=pltpu.CompilerParams(
            dimension_semantics=("parallel",),
            vmem_limit_bytes=32 * 1024 * 1024),
    )(embed_in, w_in, b_cat, wl_pad, bl_pad)

    return out_pad[:, :C]


def reference_forward(token_ids, params, Ks, *, use_bf16=True):
    """Pure-JAX reference mirroring the PyTorch forward (for validation)."""
    embed = params["embedding"][token_ids].astype(jnp.float32)   # (B, L, D)
    if use_bf16:
        embed = embed.astype(jnp.bfloat16).astype(jnp.float32)
    L = embed.shape[1]
    feats = []
    for kk in Ks:
        w = params[f"conv_w_{kk}"]          # (kk, D, F)
        if use_bf16:
            w = w.astype(jnp.bfloat16).astype(jnp.float32)
        b = params[f"conv_b_{kk}"][0]       # (F,)
        L_out = L - kk + 1
        windows = jnp.stack(
            [embed[:, i:i + L_out, :] for i in range(kk)], axis=2)  # (B,L_out,kk,D)
        conv = jnp.einsum("blkd,kdf->blf", windows, w) + b
        conv = jnp.maximum(conv, 0.0)
        feats.append(conv.max(axis=1))
    feat = jnp.concatenate(feats, axis=1)
    return feat @ params["lin_w"] + params["lin_b"][0]


def init_params(key, vocab, D, C, n_filters, Ks):
    params = {}
    keys = jax.random.split(key, 3 + 2 * len(Ks))
    params["embedding"] = jax.random.normal(keys[0], (vocab, D), jnp.float32) * 0.1
    for j, kk in enumerate(Ks):
        params[f"conv_w_{kk}"] = (
            jax.random.normal(keys[1 + 2 * j], (kk, D, n_filters), jnp.float32) * 0.1)
        params[f"conv_b_{kk}"] = (
            jax.random.normal(keys[2 + 2 * j], (1, n_filters), jnp.float32) * 0.1)
    params["lin_w"] = (
        jax.random.normal(keys[-2], (n_filters * len(Ks), C), jnp.float32) * 0.1)
    params["lin_b"] = (
        jax.random.normal(keys[-1], (1, C), jnp.float32) * 0.1)
    return params


if __name__ == "__main__":
    # Small config consistent with the module's args:
    #   words_dict=100, embed_dim=32, class_num=4, n_filters=8, kernel_sizes=(3,4,5)
    VOCAB, D, C, NF = 100, 32, 4, 8
    Ks = (3, 4, 5)
    B, L = 2, 16

    key = jax.random.PRNGKey(0)
    k_tok, k_par = jax.random.split(key)
    token_ids = jax.random.randint(k_tok, (B, L), 0, VOCAB, dtype=jnp.int32)
    params = init_params(k_par, VOCAB, D, C, NF, Ks)

    # TODO(synk): the dropout attribute in the PyTorch module is never applied
    # in forward(), so it is intentionally omitted here.

    logits = textcnn_forward(token_ids, params, Ks, NF)
    logits = jax.block_until_ready(logits)

    ref = reference_forward(token_ids, params, Ks)
    assert logits.shape == (B, C)
    assert jnp.allclose(logits, ref, atol=1e-3, rtol=1e-3), (
        float(jnp.max(jnp.abs(logits - ref))))
    print("KERNEL_OK")
</pallas_src>

<mosaic_0001>
module attributes {stable_mosaic.version = 11 : i64} {
  func.func @kernel(%arg0: i32, %arg1: memref<2x16x32xbf16, #tpu.memory_space<vmem>>, %arg2: memref<32x128xbf16, #tpu.memory_space<vmem>>, %arg3: memref<1x24xf32, #tpu.memory_space<vmem>>, %arg4: memref<24x128xf32, #tpu.memory_space<vmem>>, %arg5: memref<1x128xf32, #tpu.memory_space<vmem>>, %arg6: memref<2x128xf32, #tpu.memory_space<vmem>>) attributes {dimension_semantics = [#tpu.dimension_semantics<parallel>], iteration_bounds = array<i64: 1>, scalar_prefetch = 0 : i64, scratch_operands = 0 : i64, tpu.core_type = #tpu.core_type<tc>, window_params = [{transform_indices = @transform_0, window_bounds = array<i64: 2, 16, 32>}, {pipeline_mode = #tpu.pipeline_mode<synchronous>, transform_indices = @transform_1, window_bounds = array<i64: 32, 128>}, {pipeline_mode = #tpu.pipeline_mode<synchronous>, transform_indices = @transform_2, window_bounds = array<i64: 1, 24>}, {pipeline_mode = #tpu.pipeline_mode<synchronous>, transform_indices = @transform_3, window_bounds = array<i64: 24, 128>}, {pipeline_mode = #tpu.pipeline_mode<synchronous>, transform_indices = @transform_4, window_bounds = array<i64: 1, 128>}, {transform_indices = @transform_5, window_bounds = array<i64: 2, 128>}]} {
    %c0 = arith.constant 0 : index
    %c0_0 = arith.constant 0 : index
    %c0_1 = arith.constant 0 : index
    %0 = vector.load %arg1[%c0, %c0_0, %c0_1] : memref<2x16x32xbf16, #tpu.memory_space<vmem>>, vector<2x16x32xbf16>
    %1 = vector.shape_cast %0 : vector<2x16x32xbf16> to vector<32x32xbf16>
    %c0_2 = arith.constant 0 : index
    %c0_3 = arith.constant 0 : index
    %2 = vector.load %arg2[%c0_2, %c0_3] : memref<32x128xbf16, #tpu.memory_space<vmem>>, vector<32x128xbf16>
    %cst = arith.constant dense<0.000000e+00> : vector<32x128xf32>
    %3 = tpu.matmul %1, %2, %cst {dimension_numbers = #tpu.dot_dimension_numbers<[1], [0], [0], [1], [0, 0, 1, 1], [], []>} : vector<32x32xbf16>, vector<32x128xbf16>, vector<32x128xf32> -> vector<32x128xf32>
    %4 = vector.extract_strided_slice %3 {offsets = [0, 0], sizes = [32, 24], strides = [1, 1]} : vector<32x128xf32> to vector<32x24xf32>
    %c0_4 = arith.constant 0 : index
    %c0_5 = arith.constant 0 : index
    %5 = vector.load %arg3[%c0_4, %c0_5] : memref<1x24xf32, #tpu.memory_space<vmem>>, vector<1x24xf32>
    %6 = vector.broadcast %5 : vector<1x24xf32> to vector<32x24xf32>
    %7 = arith.addf %4, %6 : vector<32x24xf32>
    %c31_i32 = arith.constant 31 : i32
    %8 = tpu.dynamic_rotate %3 by %c31_i32 dim 0 : vector<32x128xf32>, i32 -> vector<32x128xf32>
    %9 = vector.extract_strided_slice %8 {offsets = [0, 24], sizes = [32, 24], strides = [1, 1]} : vector<32x128xf32> to vector<32x24xf32>
    %10 = arith.addf %7, %9 : vector<32x24xf32>
    %c30_i32 = arith.constant 30 : i32
    %11 = tpu.dynamic_rotate %3 by %c30_i32 dim 0 : vector<32x128xf32>, i32 -> vector<32x128xf32>
    %12 = vector.extract_strided_slice %11 {offsets = [0, 48], sizes = [32, 24], strides = [1, 1]} : vector<32x128xf32> to vector<32x24xf32>
    %13 = arith.addf %10, %12 : vector<32x24xf32>
    %c29_i32 = arith.constant 29 : i32
    %14 = tpu.dynamic_rotate %3 by %c29_i32 dim 0 : vector<32x128xf32>, i32 -> vector<32x128xf32>
    %15 = vector.extract_strided_slice %14 {offsets = [0, 72], sizes = [32, 24], strides = [1, 1]} : vector<32x128xf32> to vector<32x24xf32>
    %16 = arith.addf %13, %15 : vector<32x24xf32>
    %c28_i32 = arith.constant 28 : i32
    %17 = tpu.dynamic_rotate %3 by %c28_i32 dim 0 : vector<32x128xf32>, i32 -> vector<32x128xf32>
    %18 = vector.extract_strided_slice %17 {offsets = [0, 96], sizes = [32, 24], strides = [1, 1]} : vector<32x128xf32> to vector<32x24xf32>
    %19 = arith.addf %16, %18 : vector<32x24xf32>
    %cst_6 = arith.constant 0.000000e+00 : f32
    %20 = vector.broadcast %cst_6 : f32 to vector<32x24xf32>
    %21 = arith.maximumf %19, %20 : vector<32x24xf32>
    %22 = tpu.iota {dimensions = array<i32: 0>} : vector<32x24xi32>
    %23 = tpu.iota {dimensions = array<i32: 1>} : vector<32x24xi32>
    %c16_i32 = arith.constant 16 : i32
    %c0_i32 = arith.constant 0 : i32
    %24 = arith.cmpi eq, %c16_i32, %c0_i32 : i32
    %c1_i32 = arith.constant 1 : i32
    %25 = arith.select %24, %c1_i32, %c16_i32 : i32
    %26 = vector.broadcast %25 : i32 to vector<32x24xi32>
    %27 = arith.remsi %22, %26 : vector<32x24xi32>
    %c0_i32_7 = arith.constant 0 : i32
    %28 = vector.broadcast %c0_i32_7 : i32 to vector<32x24xi32>
    %29 = arith.cmpi ne, %27, %28 : vector<32x24xi32>
    %c0_i32_8 = arith.constant 0 : i32
    %30 = vector.broadcast %c0_i32_8 : i32 to vector<32x24xi32>
    %31 = arith.cmpi slt, %27, %30 : vector<32x24xi32>
    %c0_i32_9 = arith.constant 0 : i32
    %32 = arith.cmpi slt, %25, %c0_i32_9 : i32
    %33 = vector.broadcast %32 : i1 to vector<32x24xi1>
    %34 = vector.broadcast %33 : vector<32x24xi1> to vector<32x24xi1>
    %35 = arith.xori %31, %34 : vector<32x24xi1>
    %36 = arith.andi %35, %29 : vector<32x24xi1>
    %37 = vector.broadcast %25 : i32 to vector<32x24xi32>
    %38 = arith.addi %27, %37 : vector<32x24xi32>
    %39 = arith.select %36, %38, %27 : vector<32x24xi1>, vector<32x24xi32>
    %c0_i32_10 = arith.constant 0 : i32
    %40 = vector.broadcast %c0_i32_10 : i32 to vector<32x24xi32>
    %c0_i32_11 = arith.constant 0 : i32
    %41 = vector.broadcast %c0_i32_11 : i32 to vector<32x24xi32>
    %42 = arith.cmpi sge, %23, %41 : vector<32x24xi32>
    %c8_i32 = arith.constant 8 : i32
    %43 = vector.broadcast %c8_i32 : i32 to vector<32x24xi32>
    %44 = arith.cmpi slt, %23, %43 : vector<32x24xi32>
    %45 = arith.andi %42, %44 : vector<32x24xi1>
    %c14_i32 = arith.constant 14 : i32
    %46 = vector.broadcast %c14_i32 : i32 to vector<32x24xi32>
    %47 = arith.select %45, %46, %40 : vector<32x24xi1>, vector<32x24xi32>
    %c8_i32_12 = arith.constant 8 : i32
    %48 = vector.broadcast %c8_i32_12 : i32 to vector<32x24xi32>
    %49 = arith.cmpi sge, %23, %48 : vector<32x24xi32>
    %c16_i32_13 = arith.constant 16 : i32
    %50 = vector.broadcast %c16_i32_13 : i32 to vector<32x24xi32>
    %51 = arith.cmpi slt, %23, %50 : vector<32x24xi32>
    %52 = arith.andi %49, %51 : vector<32x24xi1>
    %c13_i32 = arith.constant 13 : i32
    %53 = vector.broadcast %c13_i32 : i32 to vector<32x24xi32>
    %54 = arith.select %52, %53, %47 : vector<32x24xi1>, vector<32x24xi32>
    %c16_i32_14 = arith.constant 16 : i32
    %55 = vector.broadcast %c16_i32_14 : i32 to vector<32x24xi32>
    %56 = arith.cmpi sge, %23, %55 : vector<32x24xi32>
    %c24_i32 = arith.constant 24 : i32
    %57 = vector.broadcast %c24_i32 : i32 to vector<32x24xi32>
    %58 = arith.cmpi slt, %23, %57 : vector<32x24xi32>
    %59 = arith.andi %56, %58 : vector<32x24xi1>
    %c12_i32 = arith.constant 12 : i32
    %60 = vector.broadcast %c12_i32 : i32 to vector<32x24xi32>
    %61 = arith.select %59, %60, %54 : vector<32x24xi1>, vector<32x24xi32>
    %62 = arith.cmpi slt, %39, %61 : vector<32x24xi32>
    %cst_15 = arith.constant 0.000000e+00 : f32
    %63 = vector.broadcast %cst_15 : f32 to vector<32x24xf32>
    %64 = arith.select %62, %21, %63 : vector<32x24xi1>, vector<32x24xf32>
    %65 = vector.shape_cast %64 : vector<32x24xf32> to vector<2x16x24xf32>
    %cst_16 = arith.constant dense<0xFF800000> : vector<2x24xf32>
    %66 = vector.multi_reduction <maximumf>, %65, %cst_16 [1] : vector<2x16x24xf32> to vector<2x24xf32>
    %c0_17 = arith.constant 0 : index
    %c0_18 = arith.constant 0 : index
    %67 = vector.load %arg4[%c0_17, %c0_18] : memref<24x128xf32, #tpu.memory_space<vmem>>, vector<24x128xf32>
    %cst_19 = arith.constant dense<0.000000e+00> : vector<2x128xf32>
    %68 = tpu.matmul %66, %67, %cst_19 {dimension_numbers = #tpu.dot_dimension_numbers<[1], [0], [0], [1], [0, 0, 1, 1], [], []>} : vector<2x24xf32>, vector<24x128xf32>, vector<2x128xf32> -> vector<2x128xf32>
    %c0_20 = arith.constant 0 : index
    %c0_21 = arith.constant 0 : index
    %69 = vector.load %arg5[%c0_20, %c0_21] : memref<1x128xf32, #tpu.memory_space<vmem>>, vector<1x128xf32>
    %70 = vector.broadcast %69 : vector<1x128xf32> to vector<2x128xf32>
    %71 = arith.addf %68, %70 : vector<2x128xf32>
    %c0_22 = arith.constant 0 : index
    %c0_23 = arith.constant 0 : index
    %72 = vector.load %arg6[%c0_22, %c0_23] : memref<2x128xf32, #tpu.memory_space<vmem>>, vector<2x128xf32>
    tpu.vector_store %arg6[%c0_22, %c0_23], %71 {strides = array<i32>} : memref<2x128xf32, #tpu.memory_space<vmem>>, vector<2x128xf32>,
    return
  }
  func.func @transform_0(%arg0: i32) -> (i32, i32, i32) {
    %c0_i32 = arith.constant 0 : i32
    %c0_i32_0 = arith.constant 0 : i32
    %c0_i32_1 = arith.constant 0 : i32
    return %arg0, %c0_i32, %c0_i32_0 : i32, i32, i32
  }
  func.func @transform_1(%arg0: i32) -> (i32, i32) {
    %c0_i32 = arith.constant 0 : i32
    %c0_i32_0 = arith.constant 0 : i32
    %c0_i32_1 = arith.constant 0 : i32
    return %c0_i32, %c0_i32_0 : i32, i32
  }
  func.func @transform_2(%arg0: i32) -> (i32, i32) {
    %c0_i32 = arith.constant 0 : i32
    %c0_i32_0 = arith.constant 0 : i32
    %c0_i32_1 = arith.constant 0 : i32
    return %c0_i32, %c0_i32_0 : i32, i32
  }
  func.func @transform_3(%arg0: i32) -> (i32, i32) {
    %c0_i32 = arith.constant 0 : i32
    %c0_i32_0 = arith.constant 0 : i32
    %c0_i32_1 = arith.constant 0 : i32
    return %c0_i32, %c0_i32_0 : i32, i32
  }
  func.func @transform_4(%arg0: i32) -> (i32, i32) {
    %c0_i32 = arith.constant 0 : i32
    %c0_i32_0 = arith.constant 0 : i32
    %c0_i32_1 = arith.constant 0 : i32
    return %c0_i32, %c0_i32_0 : i32, i32
  }
  func.func @transform_5(%arg0: i32) -> (i32, i32) {
    %c0_i32 = arith.constant 0 : i32
    %c0_i32_0 = arith.constant 0 : i32
    return %arg0, %c0_i32 : i32, i32
  }
}

</mosaic_0001>

<llo_original>
// kernel: tpu_custom_call.1
$region0: #{tpu_custom_call.1}
  #allocation0 [shape = 'u32[]', space=smem, size = 0x4, offset = 0x4, fixed_abs, tag = 'smem constant byte address 0x4 - core index']
  #allocation1 [shape = 'u32[144,128]{1,0:T(1,128)}', space=vmem, size = 0x12000, scoped, tag = 'internal scratch']
  %s0 = inlined_call_operand.hbm [shape: bf16[2,16,32], index: 0, kind: input, shape index: {}]
  %s1 = inlined_call_operand.hbm [shape: bf16[32,128], index: 1, kind: input, shape index: {}]
  %s2 = inlined_call_operand.vmem [shape: f32[1,24], index: 2, kind: input, shape index: {}]
  %s3 = inlined_call_operand.hbm [shape: f32[24,128], index: 3, kind: input, shape index: {}]
  %s4 = inlined_call_operand.vmem [shape: f32[1,128], index: 4, kind: input, shape index: {}]
  %s5 = inlined_call_operand.hbm [shape: f32[2,128], index: 5, kind: output, shape index: {}]
  %s6 = sld [smem:[#allocation0]]
  $region42: #{tpu_custom_call.1} parent=0
    _
  %s8 = ssub.s32 1, %s6
  %s9 = scalar_select 0, %s8, %s6
  $region1: #{tpu_custom_call.1} parent=0
    #allocation2 [shape = 'u8[8192]{0}', space=vmem, size = 0x2000, scoped, tag = 'input window, operand 0, single buffered']
    #allocation3 [shape = 's32[1]{0}', space=sflag, size = 0x4, scoped, tag = 'scoped memory for tpu_custom_call.1']
    #allocation4 [shape = 's32[1]{0}', space=sflag, size = 0x4, scoped, tag = 'scoped memory for tpu_custom_call.1']
    #allocation5 [shape = 'u8[8192]{0}', space=vmem, size = 0x2000, scoped, tag = 'input window, operand 1, single buffered']
    #allocation6 [shape = 's32[1]{0}', space=sflag, size = 0x4, scoped, tag = 'scoped memory for tpu_custom_call.1']
    #allocation7 [shape = 'u8[12288]{0}', space=vmem, size = 0x3000, scoped, tag = 'input window, operand 3, single buffered']
    #allocation8 [shape = 'u8[1024]{0}', space=vmem, size = 0x400, scoped, tag = 'output window, operand 0, single buffered']
    %10 = vsyncpa [#allocation3], 0
    %11 = vsyncpa [#allocation6], 0
    %12 = vsyncpa [#allocation4], 0
    // Predicated region
    $region2: #{tpu_custom_call.1} parent=1 // pred_check
      _
    $region3: #{tpu_custom_call.1} parent=1 // pred_check_branch
      %14 = sbr.rel (0) target = $region5
    $region4: #{tpu_custom_call.1} parent=1 // pred_region
      %s16 = ssub.s32 256, 256
      %17 = vsyncadd [#allocation3], %s16
      %s18 = sshll.u32 [#allocation2], 4
      %s19 = int_to_ptr.vmem [resolvable:$true] %s18
      %24 = dma.hbm_to_vmem [thread:$0]  %s0, 256, %s19, [#allocation3], 64, 64, 4
    $region5: #{tpu_custom_call.1} parent=1 // pred_fallthru
      _
    // Predicated region
    $region6: #{tpu_custom_call.1} parent=1 // pred_check
      _
    $region7: #{tpu_custom_call.1} parent=1 // pred_check_branch
      %26 = sbr.rel (0) target = $region9
    $region8: #{tpu_custom_call.1} parent=1 // pred_region
      %s28 = ssub.s32 256, 256
      %29 = vsyncadd [#allocation6], %s28
      %s30 = sshll.u32 [#allocation5], 4
      %s31 = int_to_ptr.vmem [resolvable:$true] %s30
      %36 = dma.hbm_to_vmem [thread:$0]  %s1, 256, %s31, [#allocation6], 64, 64, 4
    $region9: #{tpu_custom_call.1} parent=1 // pred_fallthru
      _
    // Predicated region
    $region10: #{tpu_custom_call.1} parent=1 // pred_check
      _
    $region11: #{tpu_custom_call.1} parent=1 // pred_check_branch
      %38 = sbr.rel (0) target = $region13
    $region12: #{tpu_custom_call.1} parent=1 // pred_region
      _
    $region13: #{tpu_custom_call.1} parent=1 // pred_fallthru
      _
    // Predicated region
    $region14: #{tpu_custom_call.1} parent=1 // pred_check
      _
    $region15: #{tpu_custom_call.1} parent=1 // pred_check_branch
      %40 = sbr.rel (0) target = $region17
    $region16: #{tpu_custom_call.1} parent=1 // pred_region
      %s42 = ssub.s32 384, 384
      %43 = vsyncadd [#allocation6], %s42
      %s44 = sshll.u32 [#allocation7], 4
      %s45 = int_to_ptr.vmem [resolvable:$true] %s44
      %50 = dma.hbm_to_vmem [thread:$0]  %s3, 384, %s45, [#allocation6], 128, 128, 8
    $region17: #{tpu_custom_call.1} parent=1 // pred_fallthru
      _
    // Predicated region
    $region18: #{tpu_custom_call.1} parent=1 // pred_check
      _
    $region19: #{tpu_custom_call.1} parent=1 // pred_check_branch
      %52 = sbr.rel (0) target = $region21
    $region20: #{tpu_custom_call.1} parent=1 // pred_region
      _
    $region21: #{tpu_custom_call.1} parent=1 // pred_fallthru
      _
    // Predicated region
    $region22: #{tpu_custom_call.1} parent=1 // pred_check
      _
    $region23: #{tpu_custom_call.1} parent=1 // pred_check_branch
      %54 = sbr.rel (0) target = $region25
    $region24: #{tpu_custom_call.1} parent=1 // pred_region
      %55 = dma.done [#allocation3], 256
    $region25: #{tpu_custom_call.1} parent=1 // pred_fallthru
      _
    // Predicated region
    $region26: #{tpu_custom_call.1} parent=1 // pred_check
      _
    $region27: #{tpu_custom_call.1} parent=1 // pred_check_branch
      %57 = sbr.rel (0) target = $region29
    $region28: #{tpu_custom_call.1} parent=1 // pred_region
      %58 = dma.done [#allocation6], 256
    $region29: #{tpu_custom_call.1} parent=1 // pred_fallthru
      _
    // Predicated region
    $region30: #{tpu_custom_call.1} parent=1 // pred_check
      _
    $region31: #{tpu_custom_call.1} parent=1 // pred_check_branch
      %60 = sbr.rel (0) target = $region33
    $region32: #{tpu_custom_call.1} parent=1 // pred_region
      %61 = dma.done [#allocation6], 384
    $region33: #{tpu_custom_call.1} parent=1 // pred_fallthru
      _
    %v63 = vld [vmem:[#allocation2] sm:$0xf]
    %v64 = vld [vmem:[#allocation2 + $0x4] sm:$0xf]
    %v65 = vld [vmem:[#allocation2 + $0x8] sm:$0xf]
    %v66 = vld [vmem:[#allocation2 + $0xc] sm:$0xf]
    %v67 = vld [vmem:[#allocation5] sm:$0xf]
    %v68 = vld [vmem:[#allocation5 + $0x4] sm:$0xf]
    %v69 = vld [vmem:[#allocation5 + $0x8] sm:$0xf]
    %v70 = vld [vmem:[#allocation5 + $0xc] sm:$0xf]
    %v75 = vunpack.c.l.b16 %v63
    %v76 = vunpack.c.l.b16 %v64
    %v77 = vunpack.c.l.b16 %v65
    %v78 = vunpack.c.l.b16 %v66
    %v79 = vpack.c.b16 %v76, %v75
    %v80 = vpack.c.b16 %v78, %v77
    %v85 = vunpack.c.l.b16 %v67
    %v86 = vunpack.c.l.b16 %v68
    %v87 = vunpack.c.l.b16 %v69
    %v88 = vunpack.c.l.b16 %v70
    %v89 = vpack.c.b16 %v86, %v85
    %v90 = vpack.c.b16 %v88, %v87
    %vm93 = vcmask 261120
    %v95 = vsel %vm93, %v79, 0
    %v98 = vsel %vm93, %v80, 0
    %100 = vmatprep.subr.bf16.mxu0 0
    %101 = vmatpush1.bf16.msra.mxu0 %v89
    %102 = vmatprep.subr.bf16.mxu0 0
    %103 = vmatpush1.bf16.msra.mxu0 %v90
    %104 = vmatprep.subr.bf16.mxu0 0
    %105 = vmatpush1.bf16.msra.mxu0 0
    %106 = vmatprep.subr.bf16.mxu0 0
    %107 = vmatpush1.bf16.msra.mxu0 0
    %108 = vmatprep.subr.bf16.mxu0 0
    %109 = vmatpush1.bf16.msra.mxu0 0
    %110 = vmatprep.subr.bf16.mxu0 0
    %111 = vmatpush1.bf16.msra.mxu0 0
    %112 = vmatprep.subr.bf16.mxu0 0
    %113 = vmatpush1.bf16.msra.mxu0 0
    %114 = vmatprep.subr.bf16.mxu0 0
    %115 = vmatpush1.bf16.msra.mxu0 0
    %116 = vmatprep.subr.bf16.mxu0 0
    %117 = vmatpush1.bf16.msra.mxu0 0
    %118 = vmatprep.subr.bf16.mxu0 0
    %119 = vmatpush1.bf16.msra.mxu0 0
    %120 = vmatprep.subr.bf16.mxu0 0
    %121 = vmatpush1.bf16.msra.mxu0 0
    %122 = vmatprep.subr.bf16.mxu0 0
    %123 = vmatpush1.bf16.msra.mxu0 0
    %124 = vmatprep.subr.bf16.mxu0 0
    %125 = vmatpush1.bf16.msra.mxu0 0
    %126 = vmatprep.subr.bf16.mxu0 0
    %127 = vmatpush1.bf16.msra.mxu0 0
    %128 = vmatprep.subr.bf16.mxu0 0
    %129 = vmatpush1.bf16.msra.mxu0 0
    %130 = vmatprep.subr.bf16.mxu0 0
    %131 = vmatpush1.bf16.msra.mxu0 0
    %132 = vmatprep.mubr.bf16.mxu0 0
    %133 = vmatmul.mubr.bf16.gmra.mrb[0].mxu0 %v95
    %v134 = vpop.f32.mrb[0].mxu0
    %v135 = vadd.f32 0.0, %v134
    %v136 = vpop.f32.mrb[0].mxu0
    %v137 = vpop.f32.mrb[0].mxu0
    %v138 = vadd.f32 0.0, %v137
    %v139 = vpop.f32.mrb[0].mxu0
    %140 = vmatprep.mubr.bf16.mxu0 0
    %141 = vmatmul.mubr.bf16.gmra.mrb[0].mxu0 %v98
    %v142 = vpop.f32.mrb[0].mxu0
    %v143 = vadd.f32 0.0, %v142
    %v144 = vpop.f32.mrb[0].mxu0
    %v145 = vpop.f32.mrb[0].mxu0
    %v146 = vadd.f32 0.0, %v145
    %v147 = vpop.f32.mrb[0].mxu0
    %148 = vdwg.mxu0
    %v149 = vld [vmem:[%s2] sm:$0x1]
    %v151 = vlaneseq
    %v152 = vshrl.u32 %v151, 7
    %v153 = vsub.s32 0, %v152
    %v154 = vrot.slane %v149, %v153
    %v156 = vadd.f32 %v135, %v154
    %v157 = vadd.f32 %v138, %v154
    %v158 = vadd.f32 %v143, %v154
    %v159 = vadd.f32 %v146, %v154
    %v160 = vrot.slane %v135, 1
    %v161 = vrot.slane %v138, 1
    %v162 = vrot.slane %v143, 1
    %v163 = vrot.slane %v146, 1
    %v164 = vlaneseq
    %v165 = vshrl.u32 %v164, 7
    %vm166 = vcmp.lt.s32.totalorder %v165, 7
    %v167 = vsel %vm166, %v162, %v163
    %v168 = vsel %vm166, %v161, %v162
    %v169 = vsel %vm166, %v160, %v161
    %v170 = vsel %vm166, %v163, %v160
    %175 = vrot.lane.b32.xlu0 %v169, 104
    %v176 = vpop.permute.xlu0 %175
    %177 = vrot.lane.b32.xlu0 %v168, 104
    %v178 = vpop.permute.xlu0 %177
    %179 = vrot.lane.b32.xlu0 %v167, 104
    %v180 = vpop.permute.xlu0 %179
    %181 = vrot.lane.b32.xlu0 %v170, 104
    %v182 = vpop.permute.xlu0 %181
    %v187 = vadd.f32 %v156, %v176
    %v188 = vadd.f32 %v157, %v178
    %v189 = vadd.f32 %v158, %v180
    %v190 = vadd.f32 %v159, %v182
    %v191 = vrot.slane %v135, 2
    %v192 = vrot.slane %v138, 2
    %v193 = vrot.slane %v143, 2
    %v194 = vrot.slane %v146, 2
    %vm195 = vcmp.lt.s32.totalorder %v165, 6
    %v196 = vsel %vm195, %v193, %v194
    %v197 = vsel %vm195, %v192, %v193
    %v198 = vsel %vm195, %v191, %v192
    %v199 = vsel %vm195, %v194, %v191
    %204 = vrot.lane.b32.xlu0 %v198, 80
    %v205 = vpop.permute.xlu0 %204
    %206 = vrot.lane.b32.xlu0 %v197, 80
    %v207 = vpop.permute.xlu0 %206
    %208 = vrot.lane.b32.xlu0 %v196, 80
    %v209 = vpop.permute.xlu0 %208
    %210 = vrot.lane.b32.xlu0 %v199, 80
    %v211 = vpop.permute.xlu0 %210
    %v216 = vadd.f32 %v187, %v205
    %v217 = vadd.f32 %v188, %v207
    %v218 = vadd.f32 %v189, %v209
    %v219 = vadd.f32 %v190, %v211
    %v220 = vrot.slane %v135, 3
    %v221 = vrot.slane %v138, 3
    %v222 = vrot.slane %v143, 3
    %v223 = vrot.slane %v146, 3
    %vm224 = vcmp.lt.s32.totalorder %v165, 5
    %v225 = vsel %vm224, %v222, %v223
    %v226 = vsel %vm224, %v221, %v222
    %v227 = vsel %vm224, %v220, %v221
    %v228 = vsel %vm224, %v223, %v220
    %233 = vrot.lane.b32.xlu0 %v227, 56
    %v234 = vpop.permute.xlu0 %233
    %235 = vrot.lane.b32.xlu0 %v226, 56
    %v236 = vpop.permute.xlu0 %235
    %237 = vrot.lane.b32.xlu0 %v225, 56
    %v238 = vpop.permute.xlu0 %237
    %239 = vrot.lane.b32.xlu0 %v228, 56
    %v240 = vpop.permute.xlu0 %239
    %v245 = vadd.f32 %v216, %v234
    %v246 = vadd.f32 %v217, %v236
    %v247 = vadd.f32 %v218, %v238
    %v248 = vadd.f32 %v219, %v240
    %v249 = vrot.slane %v135, 4
    %v250 = vrot.slane %v138, 4
    %v251 = vrot.slane %v143, 4
    %v252 = vrot.slane %v146, 4
    %vm253 = vcmp.lt.s32.totalorder %v165, 4
    %v254 = vsel %vm253, %v251, %v252
    %v255 = vsel %vm253, %v250, %v251
    %v256 = vsel %vm253, %v249, %v250
    %v257 = vsel %vm253, %v252, %v249
    %262 = vrot.lane.b32.xlu0 %v256, 32
    %v263 = vpop.permute.xlu0 %262
    %264 = vrot.lane.b32.xlu0 %v255, 32
    %v265 = vpop.permute.xlu0 %264
    %266 = vrot.lane.b32.xlu0 %v254, 32
    %v267 = vpop.permute.xlu0 %266
    %268 = vrot.lane.b32.xlu0 %v257, 32
    %v269 = vpop.permute.xlu0 %268
    %v274 = vadd.f32 %v245, %v263
    %v275 = vadd.f32 %v246, %v265
    %v276 = vadd.f32 %v247, %v267
    %v277 = vadd.f32 %v248, %v269
    %v278 = vmax.f32 %v274, 0.0
    %v279 = vmax.f32 %v275, 0.0
    %v280 = vmax.f32 %v276, 0.0
    %v281 = vmax.f32 %v277, 0.0
    %v282 = vadd.s32 %v165, 8
    %v283 = vadd.s32 %v165, 16
    %v284 = vadd.s32 %v165, 24
    %v285 = vlaneseq
    %v286 = vand.u32 %v285, 127
    %vm287 = vcmp.lt.s32.totalorder %v165, 0
    %v288 = vsub.s32 0, %v165
    %v289 = vsel %vm287, %v288, %v165
    %v290 = vshrl.u32 %v289, 4
    %v291 = vand.u32 %v289, 15
    %v292 = vsub.s32 0, %v291
    %v293 = vsel %vm287, %v292, %v291
    %vm294 = vcmp.lt.s32.totalorder %v282, 0
    %v295 = vsub.s32 0, %v282
    %v296 = vsel %vm294, %v295, %v282
    %v297 = vshrl.u32 %v296, 4
    %v298 = vand.u32 %v296, 15
    %v299 = vsub.s32 0, %v298
    %v300 = vsel %vm294, %v299, %v298
    %vm301 = vcmp.lt.s32.totalorder %v283, 0
    %v302 = vsub.s32 0, %v283
    %v303 = vsel %vm301, %v302, %v283
    %v304 = vshrl.u32 %v303, 4
    %v305 = vand.u32 %v303, 15
    %v306 = vsub.s32 0, %v305
    %v307 = vsel %vm301, %v306, %v305
    %vm308 = vcmp.lt.s32.totalorder %v284, 0
    %v309 = vsub.s32 0, %v284
    %v310 = vsel %vm308, %v309, %v284
    %v311 = vshrl.u32 %v310, 4
    %v312 = vand.u32 %v310, 15
    %v313 = vsub.s32 0, %v312
    %v314 = vsel %vm308, %v313, %v312
    %vm315 = vcmp.ne.s32.totalorder %v293, 0
    %vm316 = vcmp.ne.s32.totalorder %v300, 0
    %vm317 = vcmp.ne.s32.totalorder %v307, 0
    %vm318 = vcmp.ne.s32.totalorder %v314, 0
    %vm319 = vcmp.lt.s32.totalorder %v293, 0
    %vm320 = vcmp.lt.s32.totalorder %v300, 0
    %vm321 = vcmp.lt.s32.totalorder %v307, 0
    %vm322 = vcmp.lt.s32.totalorder %v314, 0
    %vm323 = vmand %vm319, %vm315
    %vm324 = vmand %vm320, %vm316
    %vm325 = vmand %vm321, %vm317
    %vm326 = vmand %vm322, %vm318
    %v327 = vadd.s32 %v293, 16
    %v328 = vadd.s32 %v300, 16
    %v329 = vadd.s32 %v307, 16
    %v330 = vadd.s32 %v314, 16
    %v331 = vsel %vm323, %v327, %v293
    %v332 = vsel %vm324, %v328, %v300
    %v333 = vsel %vm325, %v329, %v307
    %v334 = vsel %vm326, %v330, %v314
    %vm335 = vcmp.ge.s32.totalorder %v286, 0
    %vm336 = vcmp.lt.s32.totalorder %v286, 8
    %vm337 = vmand %vm335, %vm336
    %v338 = vsel %vm337, 14, 0
    %vm339 = vcmp.ge.s32.totalorder %v286, 8
    %vm340 = vcmp.lt.s32.totalorder %v286, 16
    %vm341 = vmand %vm339, %vm340
    %v342 = vsel %vm341, 13, %v338
    %vm343 = vcmp.ge.s32.totalorder %v286, 16
    %vm344 = vcmp.lt.s32.totalorder %v286, 24
    %vm345 = vmand %vm343, %vm344
    %v346 = vsel %vm345, 12, %v342
    %vm347 = vcmp.lt.s32.totalorder %v331, %v346
    %vm348 = vcmp.lt.s32.totalorder %v332, %v346
    %vm349 = vcmp.lt.s32.totalorder %v333, %v346
    %vm350 = vcmp.lt.s32.totalorder %v334, %v346
    %v351 = vsel %vm347, %v278, 0.0
    %v352 = vsel %vm348, %v279, 0.0
    %v353 = vsel %vm349, %v280, 0.0
    %v354 = vsel %vm350, %v281, 0.0
    %vm355 = vcmask 195584
    %v356 = vsel %vm355, %v351, -inf
    %v357 = vsel %vm355, %v352, -inf
    %v358 = vmax.f32 %v356, %v357
    %v359 = vrot.slane %v358, 4
    %v360 = vmax.f32 %v358, %v359
    %v361 = vrot.slane %v360, 2
    %v362 = vmax.f32 %v360, %v361
    %v363 = vrot.slane %v362, 1
    %v364 = vmax.f32 %v362, %v363
    %v365 = vsel %vm355, %v353, -inf
    %v366 = vsel %vm355, %v354, -inf
    %v367 = vmax.f32 %v365, %v366
    %v368 = vrot.slane %v367, 4
    %v369 = vmax.f32 %v367, %v368
    %v370 = vrot.slane %v369, 2
    %v371 = vmax.f32 %v369, %v370
    %v372 = vrot.slane %v371, 1
    %v373 = vmax.f32 %v371, %v372
    %v374 = vld [vmem:[#allocation7] sm:$0xff]
    %v375 = vld [vmem:[#allocation7 + $0x8] sm:$0xff]
    %v376 = vld [vmem:[#allocation7 + $0x10] sm:$0xff]
    %v377 = vld [vmem:[%s4] sm:$0x1]
    %v379 = vlaneseq
    %v380 = vshrl.u32 %v379, 7
    %v381 = vsub.s32 0, %v380
    %v382 = vrot.slane %v377, %v381
    %vm386 = vcmask 1041409
    %v387 = vsel %vm386, %v373, %v364
    %v388 = vsel %vm355, %v387, 0
    %390 = vmatprep.subr.mxu0 0.0
    %391 = vmatpush1.msra.mxu0 %v374
    %392 = vmatprep.subr.mxu0 0.0
    %393 = vmatpush1.msra.mxu0 %v375
    %394 = vmatprep.subr.mxu0 0.0
    %395 = vmatpush1.msra.mxu0 %v376
    %396 = vmatprep.subr.mxu0 0.0
    %397 = vmatpush1.msra.mxu0 0.0
    %398 = vmatprep.subr.mxu0 0.0
    %399 = vmatpush1.msra.mxu0 0.0
    %400 = vmatprep.subr.mxu0 0.0
    %401 = vmatpush1.msra.mxu0 0.0
    %402 = vmatprep.subr.mxu0 0.0
    %403 = vmatpush1.msra.mxu0 0.0
    %404 = vmatprep.subr.mxu0 0.0
    %405 = vmatpush1.msra.mxu0 0.0
    %406 = vmatprep.subr.mxu0 0.0
    %407 = vmatpush1.msra.mxu0 0.0
    %408 = vmatprep.subr.mxu0 0.0
    %409 = vmatpush1.msra.mxu0 0.0
    %410 = vmatprep.subr.mxu0 0.0
    %411 = vmatpush1.msra.mxu0 0.0
    %412 = vmatprep.subr.mxu0 0.0
    %413 = vmatpush1.msra.mxu0 0.0
    %414 = vmatprep.subr.mxu0 0.0
    %415 = vmatpush1.msra.mxu0 0.0
    %416 = vmatprep.subr.mxu0 0.0
    %417 = vmatpush1.msra.mxu0 0.0
    %418 = vmatprep.subr.mxu0 0.0
    %419 = vmatpush1.msra.mxu0 0.0
    %420 = vmatprep.subr.mxu0 0.0
    %421 = vmatpush1.msra.mxu0 0.0
    %422 = vmatprep.subr.mxu0 0.0
    %423 = vmatpush1.msra.mxu0 0.0
    %424 = vmatprep.subr.mxu0 0.0
    %425 = vmatpush1.msra.mxu0 0.0
    %426 = vmatprep.subr.mxu0 0.0
    %427 = vmatpush1.msra.mxu0 0.0
    %428 = vmatprep.subr.mxu0 0.0
    %429 = vmatpush1.msra.mxu0 0.0
    %430 = vmatprep.subr.mxu0 0.0
    %431 = vmatpush1.msra.mxu0 0.0
    %432 = vmatprep.subr.mxu0 0.0
    %433 = vmatpush1.msra.mxu0 0.0
    %434 = vmatprep.subr.mxu0 0.0
    %435 = vmatpush1.msra.mxu0 0.0
    %436 = vmatprep.subr.mxu0 0.0
    %437 = vmatpush1.msra.mxu0 0.0
    %438 = vmatprep.subr.mxu0 0.0
    %439 = vmatpush1.msra.mxu0 0.0
    %440 = vmatprep.subr.mxu0 0.0
    %441 = vmatpush1.msra.mxu0 0.0
    %442 = vmatprep.subr.mxu0 0.0
    %443 = vmatpush1.msra.mxu0 0.0
    %444 = vmatprep.subr.mxu0 0.0
    %445 = vmatpush1.msra.mxu0 0.0
    %446 = vmatprep.subr.mxu0 0.0
    %447 = vmatpush1.msra.mxu0 0.0
    %448 = vmatprep.subr.mxu0 0.0
    %449 = vmatpush1.msra.mxu0 0.0
    %450 = vmatprep.subr.mxu0 0.0
    %451 = vmatpush1.msra.mxu0 0.0
    %452 = vmatprep.subr.mxu0 0.0
    %453 = vmatpush1.msra.mxu0 0.0
    %454 = vmatprep.mubr.f32.mxu0 0.0
    %455 = vmatmul.mubr.f32.gmra.mrb[0].mxu0 %v388
    %v456 = vpop.f32.mrb[0].mxu0
    %v457 = vadd.f32 %v382, %v456
    %v458 = vpop.f32.mrb[0].mxu0
    %459 = vdwg.mxu0
    %460 = vst [vmem:[#allocation8] sm:$0x3] %v457
    // Predicated region
    $region34: #{tpu_custom_call.1} parent=1 // pred_check
      _
    $region35: #{tpu_custom_call.1} parent=1 // pred_check_branch
      %462 = sbr.rel (0) target = $region37
    $region36: #{tpu_custom_call.1} parent=1 // pred_region
      %s464 = ssub.s32 32, 32
      %465 = vsyncadd [#allocation4], %s464
      %s467 = sshll.u32 [#allocation8], 4
      %s468 = int_to_ptr.vmem [resolvable:$true] %s467
      %470 = dma.vmem_to_hbm [thread:$0]  %s468, 32, %s5, [#allocation4]
    $region37: #{tpu_custom_call.1} parent=1 // pred_fallthru
      _
    // Predicated region
    $region38: #{tpu_custom_call.1} parent=1 // pred_check
      _
    $region39: #{tpu_custom_call.1} parent=1 // pred_check_branch
      %472 = sbr.rel (0) target = $region41
    $region40: #{tpu_custom_call.1} parent=1 // pred_region
      %473 = dma.done [#allocation4], 32
    $region41: #{tpu_custom_call.1} parent=1 // pred_fallthru
      _
    %474 = vsyncpa [#allocation3], 1
    %475 = vsyncpa [#allocation6], 1
    %476 = vsyncpa [#allocation4], 1

</llo_original>
